<compile_context>
chip_gen: v7x
topology: tpu7x:2x2x1
jax: 0.10.0
libtpu: 0.0.40
codegen_flags: <defaults>
</compile_context>

<pallas_src>
import jax
import jax.numpy as jnp
from jax.experimental import pallas as pl
from jax.experimental.pallas import tpu as pltpu


EMBED_DIM = 50            # module default
IN_DIM = EMBED_DIM * 2    # concat of user + movie embeddings
H1 = 128
H2 = 64
MAX_TILE_B = 2048         # per perf review: amortize ~0.35 us/grid-step overhead
SINGLE_TILE_MAX = 256     # below this, splitting the batch is pure overhead


def _round_up(x, m):
    return (x + m - 1) // m * m


def _choose_tile_b(batch):
    """Static (shape-derived) batch tile.

    Small batches run as a single tile; larger batches use >= 2 grid steps so
    the "parallel" batch axis can shard across v7x's two TensorCores, with
    tile_b a multiple of 128 so the lane-dense output blocks stay aligned.
    """
    b16 = _round_up(max(batch, 1), 16)
    if b16 <= SINGLE_TILE_MAX:
        return b16
    half = _round_up(pl.cdiv(batch, 2), 128)
    return min(MAX_TILE_B, half)


def _mlp_kernel(x_ref, w1_ref, b1_ref, w2_ref, b2_ref, w3_ref, b3_ref, o_ref):
    """x[100] -> Linear(100,128) -> ReLU -> Linear(128,64) -> ReLU -> Linear(64,1)."""
    # Layer 1: bf16 MXU matmul, f32 accumulation.  Dropout(0.4) = identity (eval).
    h1 = jnp.dot(x_ref[...], w1_ref[...],
                 preferred_element_type=jnp.float32) + b1_ref[...]
    h1 = jnp.maximum(h1, 0.0)

    # Layer 2.  Dropout(0.3) = identity (eval).
    h2 = jnp.dot(h1.astype(jnp.bfloat16), w2_ref[...],
                 preferred_element_type=jnp.float32) + b2_ref[...]
    h2 = jnp.maximum(h2, 0.0)

    # Layer 3 (64 -> 1), emitted lane-dense as a [1, tile_b] row so the store is
    # an unmasked vst (a [tile_b, 1] column would force tile_b/8 masked stores).
    out_row = jnp.dot(w3_ref[...], h2.T,
                      preferred_element_type=jnp.float32) + b3_ref[0, 0]
    o_ref[...] = out_row


@jax.jit
def recommendation_forward(params, users, movies):
    """Mirrors ImprovedRecommendationModel.forward(users, movies) in eval mode."""
    # Embedding gathers + concat + pad: plain-JAX glue, fused by jit with the
    # pallas_call.  Tables are stored bf16, so there is no per-call cast.
    user_emb = jnp.take(params["user_embedding"], users, axis=0)     # [B, 50] bf16
    movie_emb = jnp.take(params["movie_embedding"], movies, axis=0)  # [B, 50] bf16
    x = jnp.concatenate([user_emb, movie_emb], axis=1)               # [B, 100] bf16

    B = x.shape[0]
    tile_b = _choose_tile_b(B)
    Bp = _round_up(B, tile_b)
    if Bp != B:
        x = jnp.pad(x, ((0, Bp - B), (0, 0)))
    grid = (Bp // tile_b,)

    resident = lambda shape: pl.BlockSpec(shape, lambda i: (0, 0))

    out = pl.pallas_call(
        _mlp_kernel,
        out_shape=jax.ShapeDtypeStruct((1, Bp), jnp.float32),
        grid=grid,
        in_specs=[
            pl.BlockSpec((tile_b, IN_DIM), lambda i: (i, 0)),    # x tile (streamed)
            resident((IN_DIM, H1)),                              # w1 (VMEM-resident)
            resident((1, H1)),                                   # b1
            resident((H1, H2)),                                  # w2
            resident((1, H2)),                                   # b2
            resident((1, H2)),                                   # w3 row
            pl.BlockSpec(memory_space=pltpu.MemorySpace.SMEM),   # b3 scalar
        ],
        out_specs=pl.BlockSpec((1, tile_b), lambda i: (0, i)),
        compiler_params=pltpu.CompilerParams(
            dimension_semantics=("parallel",)),
    )(x, params["w1"], params["b1"], params["w2"], params["b2"],
      params["w3"], params["b3"])

    # torch: rating_prediction.squeeze()  (differs only for B == 1: shape (1,) vs scalar)
    return out[0, :B]


def init_params(key, num_users, num_movies, embedding_dim=EMBED_DIM):
    """Deterministic synthetic init (shapes match the PyTorch module)."""
    ks = jax.random.split(key, 8)

    def linear_init(kw, kb, fan_in, fan_out):
        # PyTorch nn.Linear default: U(-1/sqrt(fan_in), 1/sqrt(fan_in))
        bound = 1.0 / jnp.sqrt(jnp.float32(fan_in))
        w = jax.random.uniform(kw, (fan_in, fan_out), jnp.float32, -bound, bound)
        b = jax.random.uniform(kb, (1, fan_out), jnp.float32, -bound, bound)
        return w, b

    w1, b1 = linear_init(ks[2], ks[3], embedding_dim * 2, H1)
    w2, b2 = linear_init(ks[4], ks[5], H1, H2)
    w3, b3 = linear_init(ks[6], ks[7], H2, 1)
    return {
        # nn.Embedding default init: N(0, 1).  Stored bf16 once: halves the
        # gather's HBM traffic and the kernel consumes bf16 anyway.
        "user_embedding": jax.random.normal(
            ks[0], (num_users, embedding_dim), jnp.float32).astype(jnp.bfloat16),
        "movie_embedding": jax.random.normal(
            ks[1], (num_movies, embedding_dim), jnp.float32).astype(jnp.bfloat16),
        "w1": w1.astype(jnp.bfloat16), "b1": b1,
        "w2": w2.astype(jnp.bfloat16), "b2": b2,
        "w3": w3.reshape(1, H2), "b3": b3.reshape(1, 1),
    }


if __name__ == "__main__":
    root = jax.random.PRNGKey(0)
    k_params, k_u, k_m = jax.random.split(root, 3)

    num_users, num_movies, batch = 100, 200, 8
    params = init_params(k_params, num_users, num_movies)

    users = jax.random.randint(k_u, (batch,), 0, num_users, dtype=jnp.int32)
    movies = jax.random.randint(k_m, (batch,), 0, num_movies, dtype=jnp.int32)

    out = recommendation_forward(params, users, movies)
    out = jax.block_until_ready(out)

    # Plain-JAX reference with the same bf16 quantization points as the kernel.
    u_e = jnp.take(params["user_embedding"], users, axis=0).astype(jnp.float32)
    m_e = jnp.take(params["movie_embedding"], movies, axis=0).astype(jnp.float32)
    x = jnp.concatenate([u_e, m_e], axis=1)
    h = x @ params["w1"].astype(jnp.float32) + params["b1"]
    h = jnp.maximum(h, 0.0)
    h = h.astype(jnp.bfloat16).astype(jnp.float32) @ params["w2"].astype(jnp.float32) \
        + params["b2"]
    h = jnp.maximum(h, 0.0)
    ref = jnp.sum(h * params["w3"], axis=-1) + params["b3"][0, 0]

    assert out.shape == (batch,)
    assert jnp.allclose(out, ref, atol=1e-2, rtol=1e-2), (out, ref)
    print("KERNEL_OK")
</pallas_src>

<mosaic_0001>
module attributes {stable_mosaic.version = 11 : i64} {
  func.func @_mlp_kernel(%arg0: i32, %arg1: memref<16x100xbf16, #tpu.memory_space<vmem>>, %arg2: memref<100x128xbf16, #tpu.memory_space<vmem>>, %arg3: memref<1x128xf32, #tpu.memory_space<vmem>>, %arg4: memref<128x64xbf16, #tpu.memory_space<vmem>>, %arg5: memref<1x64xf32, #tpu.memory_space<vmem>>, %arg6: memref<1x64xf32, #tpu.memory_space<vmem>>, %arg7: memref<1x1xf32, #tpu.memory_space<smem>>, %arg8: memref<1x16xf32, #tpu.memory_space<vmem>>) attributes {dimension_semantics = [#tpu.dimension_semantics<parallel>], iteration_bounds = array<i64: 1>, scalar_prefetch = 0 : i64, scratch_operands = 0 : i64, tpu.core_type = #tpu.core_type<tc>, window_params = [{transform_indices = @transform_0, window_bounds = array<i64: 16, 100>}, {pipeline_mode = #tpu.pipeline_mode<synchronous>, transform_indices = @transform_1, window_bounds = array<i64: 100, 128>}, {pipeline_mode = #tpu.pipeline_mode<synchronous>, transform_indices = @transform_2, window_bounds = array<i64: 1, 128>}, {pipeline_mode = #tpu.pipeline_mode<synchronous>, transform_indices = @transform_3, window_bounds = array<i64: 128, 64>}, {pipeline_mode = #tpu.pipeline_mode<synchronous>, transform_indices = @transform_4, window_bounds = array<i64: 1, 64>}, {pipeline_mode = #tpu.pipeline_mode<synchronous>, transform_indices = @transform_5, window_bounds = array<i64: 1, 64>}, {transform_indices = @transform_6, window_bounds = array<i64: 1, 1>}, {transform_indices = @transform_7, window_bounds = array<i64: 1, 16>}]} {
    %c0 = arith.constant 0 : index
    %c0_0 = arith.constant 0 : index
    %0 = vector.load %arg1[%c0, %c0_0] : memref<16x100xbf16, #tpu.memory_space<vmem>>, vector<16x100xbf16>
    %c0_1 = arith.constant 0 : index
    %c0_2 = arith.constant 0 : index
    %1 = vector.load %arg2[%c0_1, %c0_2] : memref<100x128xbf16, #tpu.memory_space<vmem>>, vector<100x128xbf16>
    %cst = arith.constant dense<0.000000e+00> : vector<16x128xf32>
    %2 = tpu.matmul %0, %1, %cst {dimension_numbers = #tpu.dot_dimension_numbers<[1], [0], [0], [1], [0, 0, 1, 1], [], []>} : vector<16x100xbf16>, vector<100x128xbf16>, vector<16x128xf32> -> vector<16x128xf32>
    %c0_3 = arith.constant 0 : index
    %c0_4 = arith.constant 0 : index
    %3 = vector.load %arg3[%c0_3, %c0_4] : memref<1x128xf32, #tpu.memory_space<vmem>>, vector<1x128xf32>
    %4 = vector.broadcast %3 : vector<1x128xf32> to vector<16x128xf32>
    %5 = arith.addf %2, %4 : vector<16x128xf32>
    %cst_5 = arith.constant 0.000000e+00 : f32
    %6 = vector.broadcast %cst_5 : f32 to vector<16x128xf32>
    %7 = arith.maximumf %5, %6 : vector<16x128xf32>
    %8 = arith.truncf %7 : vector<16x128xf32> to vector<16x128xbf16>
    %c0_6 = arith.constant 0 : index
    %c0_7 = arith.constant 0 : index
    %9 = vector.load %arg4[%c0_6, %c0_7] : memref<128x64xbf16, #tpu.memory_space<vmem>>, vector<128x64xbf16>
    %cst_8 = arith.constant dense<0.000000e+00> : vector<16x64xf32>
    %10 = tpu.matmul %8, %9, %cst_8 {dimension_numbers = #tpu.dot_dimension_numbers<[1], [0], [0], [1], [0, 0, 1, 1], [], []>} : vector<16x128xbf16>, vector<128x64xbf16>, vector<16x64xf32> -> vector<16x64xf32>
    %c0_9 = arith.constant 0 : index
    %c0_10 = arith.constant 0 : index
    %11 = vector.load %arg5[%c0_9, %c0_10] : memref<1x64xf32, #tpu.memory_space<vmem>>, vector<1x64xf32>
    %12 = vector.broadcast %11 : vector<1x64xf32> to vector<16x64xf32>
    %13 = arith.addf %10, %12 : vector<16x64xf32>
    %cst_11 = arith.constant 0.000000e+00 : f32
    %14 = vector.broadcast %cst_11 : f32 to vector<16x64xf32>
    %15 = arith.maximumf %13, %14 : vector<16x64xf32>
    %c0_12 = arith.constant 0 : index
    %c0_13 = arith.constant 0 : index
    %16 = vector.load %arg6[%c0_12, %c0_13] : memref<1x64xf32, #tpu.memory_space<vmem>>, vector<1x64xf32>
    %17 = tpu.transpose %15, [1, 0] : vector<16x64xf32> -> vector<64x16xf32>
    %cst_14 = arith.constant dense<0.000000e+00> : vector<1x16xf32>
    %18 = tpu.matmul %16, %17, %cst_14 {dimension_numbers = #tpu.dot_dimension_numbers<[1], [0], [0], [1], [0, 0, 1, 1], [], []>} : vector<1x64xf32>, vector<64x16xf32>, vector<1x16xf32> -> vector<1x16xf32>
    %c0_15 = arith.constant 0 : index
    %c0_16 = arith.constant 0 : index
    %19 = memref.load %arg7[%c0_15, %c0_16] : memref<1x1xf32, #tpu.memory_space<smem>>
    %20 = vector.broadcast %19 : f32 to vector<1x16xf32>
    %21 = arith.addf %18, %20 : vector<1x16xf32>
    %c0_17 = arith.constant 0 : index
    %c0_18 = arith.constant 0 : index
    %22 = vector.load %arg8[%c0_17, %c0_18] : memref<1x16xf32, #tpu.memory_space<vmem>>, vector<1x16xf32>
    tpu.vector_store %arg8[%c0_17, %c0_18], %21 {strides = array<i32>} : memref<1x16xf32, #tpu.memory_space<vmem>>, vector<1x16xf32>,
    return
  }
  func.func @transform_0(%arg0: i32) -> (i32, i32) {
    %c0_i32 = arith.constant 0 : i32
    %c0_i32_0 = arith.constant 0 : i32
    return %arg0, %c0_i32 : i32, i32
  }
  func.func @transform_1(%arg0: i32) -> (i32, i32) {
    %c0_i32 = arith.constant 0 : i32
    %c0_i32_0 = arith.constant 0 : i32
    %c0_i32_1 = arith.constant 0 : i32
    return %c0_i32, %c0_i32_0 : i32, i32
  }
  func.func @transform_2(%arg0: i32) -> (i32, i32) {
    %c0_i32 = arith.constant 0 : i32
    %c0_i32_0 = arith.constant 0 : i32
    %c0_i32_1 = arith.constant 0 : i32
    return %c0_i32, %c0_i32_0 : i32, i32
  }
  func.func @transform_3(%arg0: i32) -> (i32, i32) {
    %c0_i32 = arith.constant 0 : i32
    %c0_i32_0 = arith.constant 0 : i32
    %c0_i32_1 = arith.constant 0 : i32
    return %c0_i32, %c0_i32_0 : i32, i32
  }
  func.func @transform_4(%arg0: i32) -> (i32, i32) {
    %c0_i32 = arith.constant 0 : i32
    %c0_i32_0 = arith.constant 0 : i32
    %c0_i32_1 = arith.constant 0 : i32
    return %c0_i32, %c0_i32_0 : i32, i32
  }
  func.func @transform_5(%arg0: i32) -> (i32, i32) {
    %c0_i32 = arith.constant 0 : i32
    %c0_i32_0 = arith.constant 0 : i32
    %c0_i32_1 = arith.constant 0 : i32
    return %c0_i32, %c0_i32_0 : i32, i32
  }
  func.func @transform_6(%arg0: i32) -> (i32, i32) {
    %c0_i32 = arith.constant 0 : i32
    %c0_i32_0 = arith.constant 0 : i32
    %c0_i32_1 = arith.constant 0 : i32
    return %c0_i32, %c0_i32_0 : i32, i32
  }
  func.func @transform_7(%arg0: i32) -> (i32, i32) {
    %c0_i32 = arith.constant 0 : i32
    %c0_i32_0 = arith.constant 0 : i32
    return %c0_i32, %arg0 : i32, i32
  }
}

</mosaic_0001>

<llo_original>
// kernel: recommendation_forward.1
$region0: #{recommendation_forward.1}
  #allocation0 [shape = 'u32[]', space=smem, size = 0x4, offset = 0x4, fixed_abs, tag = 'smem constant byte address 0x4 - core index']
  #allocation1 [shape = 'u32[144,128]{1,0:T(1,128)}', space=vmem, size = 0x12000, scoped, tag = 'internal scratch']
  #allocation2 [shape = 'f32[1,1]{1,0:T(1,128)S(6)}', space=smem, size = 0x200, scoped, tag = 'scoped memory for recommendation_forward.1']
  %s0 = inlined_call_operand.vmem [shape: bf16[16,100], index: 0, kind: input, shape index: {}]
  %s1 = inlined_call_operand.vmem [shape: bf16[100,128], index: 1, kind: input, shape index: {}]
  %s2 = inlined_call_operand.vmem [shape: f32[1,128], index: 2, kind: input, shape index: {}]
  %s3 = inlined_call_operand.vmem [shape: bf16[128,64], index: 3, kind: input, shape index: {}]
  %s4 = inlined_call_operand.vmem [shape: f32[1,64], index: 4, kind: input, shape index: {}]
  %s5 = inlined_call_operand.vmem [shape: f32[1,64], index: 5, kind: input, shape index: {}]
  %s6 = inlined_call_operand.<no memory space> [shape: f32[1,1], index: 6, kind: input, shape index: {}]
  %s7 = inlined_call_operand.vmem [shape: f32[1,16], index: 7, kind: output, shape index: {}]
  %s8 = sld [smem:[#allocation0]]
  $region38: #{recommendation_forward.1} parent=0
    _
  %s10 = ssub.s32 1, %s8
  %s11 = scalar_select 0, %s10, %s8
  %12 = sst [smem:[#allocation2]] %s6
  // Predicated region
  $region2: #{recommendation_forward.1} parent=0 // pred_check
    _
  $region3: #{recommendation_forward.1} parent=0 // pred_check_branch
    %14 = sbr.rel (0) target = $region5
  $region4: #{recommendation_forward.1} parent=0 // pred_region
    _
  $region5: #{recommendation_forward.1} parent=0 // pred_fallthru
    _
  // Predicated region
  $region6: #{recommendation_forward.1} parent=0 // pred_check
    _
  $region7: #{recommendation_forward.1} parent=0 // pred_check_branch
    %16 = sbr.rel (0) target = $region9
  $region8: #{recommendation_forward.1} parent=0 // pred_region
    _
  $region9: #{recommendation_forward.1} parent=0 // pred_fallthru
    _
  // Predicated region
  $region10: #{recommendation_forward.1} parent=0 // pred_check
    _
  $region11: #{recommendation_forward.1} parent=0 // pred_check_branch
    %18 = sbr.rel (0) target = $region13
  $region12: #{recommendation_forward.1} parent=0 // pred_region
    _
  $region13: #{recommendation_forward.1} parent=0 // pred_fallthru
    _
  // Predicated region
  $region14: #{recommendation_forward.1} parent=0 // pred_check
    _
  $region15: #{recommendation_forward.1} parent=0 // pred_check_branch
    %20 = sbr.rel (0) target = $region17
  $region16: #{recommendation_forward.1} parent=0 // pred_region
    _
  $region17: #{recommendation_forward.1} parent=0 // pred_fallthru
    _
  // Predicated region
  $region18: #{recommendation_forward.1} parent=0 // pred_check
    _
  $region19: #{recommendation_forward.1} parent=0 // pred_check_branch
    %22 = sbr.rel (0) target = $region21
  $region20: #{recommendation_forward.1} parent=0 // pred_region
    _
  $region21: #{recommendation_forward.1} parent=0 // pred_fallthru
    _
  // Predicated region
  $region22: #{recommendation_forward.1} parent=0 // pred_check
    _
  $region23: #{recommendation_forward.1} parent=0 // pred_check_branch
    %24 = sbr.rel (0) target = $region25
  $region24: #{recommendation_forward.1} parent=0 // pred_region
    _
  $region25: #{recommendation_forward.1} parent=0 // pred_fallthru
    _
  // Predicated region
  $region26: #{recommendation_forward.1} parent=0 // pred_check
    _
  $region27: #{recommendation_forward.1} parent=0 // pred_check_branch
    %26 = sbr.rel (0) target = $region29
  $region28: #{recommendation_forward.1} parent=0 // pred_region
    _
  $region29: #{recommendation_forward.1} parent=0 // pred_fallthru
    _
  %v28 = vld [vmem:[%s0] sm:$0xf]
  %v29 = vld [vmem:[%s0 + $0x4] sm:$0xf]
  %v30 = vld [vmem:[%s1] sm:$0xf]
  %v31 = vld [vmem:[%s1 + $0x4] sm:$0xf]
  %v32 = vld [vmem:[%s1 + $0x8] sm:$0xf]
  %v33 = vld [vmem:[%s1 + $0xc] sm:$0xf]
  %v34 = vld [vmem:[%s1 + $0x10] sm:$0xf]
  %v35 = vld [vmem:[%s1 + $0x14] sm:$0xf]
  %v36 = vld [vmem:[%s1 + $0x18] sm:$0xf]
  %v37 = vld [vmem:[%s1 + $0x1c] sm:$0xf]
  %v38 = vld [vmem:[%s1 + $0x20] sm:$0xf]
  %v39 = vld [vmem:[%s1 + $0x24] sm:$0xf]
  %v40 = vld [vmem:[%s1 + $0x28] sm:$0xf]
  %v41 = vld [vmem:[%s1 + $0x2c] sm:$0xf]
  %v42 = vld [vmem:[%s1 + $0x30] sm:$0x3]
  %v43 = vld [vmem:[%s2] sm:$0x1]
  %v45 = vlaneseq
  %v46 = vshrl.u32 %v45, 7
  %v47 = vsub.s32 0, %v46
  %v48 = vrot.slane %v43, %v47
  %v52 = vunpack.c.l.b16 %v28
  %v53 = vunpack.c.l.b16 %v29
  %v54 = vpack.c.b16 %v53, %v52
  %v68 = vunpack.c.l.b16 %v30
  %v69 = vunpack.c.l.b16 %v31
  %v70 = vunpack.c.l.b16 %v32
  %v71 = vunpack.c.l.b16 %v33
  %v72 = vunpack.c.l.b16 %v34
  %v73 = vunpack.c.l.b16 %v35
  %v74 = vunpack.c.l.b16 %v36
  %v75 = vunpack.c.l.b16 %v37
  %v76 = vunpack.c.l.b16 %v38
  %v77 = vunpack.c.l.b16 %v39
  %v78 = vunpack.c.l.b16 %v40
  %v79 = vunpack.c.l.b16 %v41
  %v80 = vunpack.c.l.b16 %v42
  %v81 = vpack.c.b16 %v69, %v68
  %v82 = vpack.c.b16 %v71, %v70
  %v83 = vpack.c.b16 %v73, %v72
  %v84 = vpack.c.b16 %v75, %v74
  %v85 = vpack.c.b16 %v77, %v76
  %v86 = vpack.c.b16 %v79, %v78
  %v87 = vpack.c.b16 %v80, %v80
  %vm94 = vcmask 818176
  %v96 = vsel %vm94, %v54, 0
  %vm98 = vcmask 1041408
  %v100 = vsel %vm98, %v87, 0
  %102 = vmatprep.subr.bf16.mxu0 0
  %103 = vmatpush1.bf16.msra.mxu0 %v81
  %104 = vmatprep.subr.bf16.mxu0 0
  %105 = vmatpush1.bf16.msra.mxu0 %v82
  %106 = vmatprep.subr.bf16.mxu0 0
  %107 = vmatpush1.bf16.msra.mxu0 %v83
  %108 = vmatprep.subr.bf16.mxu0 0
  %109 = vmatpush1.bf16.msra.mxu0 %v84
  %110 = vmatprep.subr.bf16.mxu0 0
  %111 = vmatpush1.bf16.msra.mxu0 %v85
  %112 = vmatprep.subr.bf16.mxu0 0
  %113 = vmatpush1.bf16.msra.mxu0 %v86
  %114 = vmatprep.subr.bf16.mxu0 0
  %115 = vmatpush1.bf16.msra.mxu0 %v100
  %116 = vmatprep.subr.bf16.mxu0 0
  %117 = vmatpush1.bf16.msra.mxu0 0
  %118 = vmatprep.subr.bf16.mxu0 0
  %119 = vmatpush1.bf16.msra.mxu0 0
  %120 = vmatprep.subr.bf16.mxu0 0
  %121 = vmatpush1.bf16.msra.mxu0 0
  %122 = vmatprep.subr.bf16.mxu0 0
  %123 = vmatpush1.bf16.msra.mxu0 0
  %124 = vmatprep.subr.bf16.mxu0 0
  %125 = vmatpush1.bf16.msra.mxu0 0
  %126 = vmatprep.subr.bf16.mxu0 0
  %127 = vmatpush1.bf16.msra.mxu0 0
  %128 = vmatprep.subr.bf16.mxu0 0
  %129 = vmatpush1.bf16.msra.mxu0 0
  %130 = vmatprep.subr.bf16.mxu0 0
  %131 = vmatpush1.bf16.msra.mxu0 0
  %132 = vmatprep.subr.bf16.mxu0 0
  %133 = vmatpush1.bf16.msra.mxu0 0
  %134 = vmatprep.mubr.bf16.mxu0 0
  %135 = vmatmul.mubr.bf16.gmra.mrb[0].mxu0 %v96
  %v136 = vpop.f32.mrb[0].mxu0
  %v137 = vadd.f32 %v48, %v136
  %v138 = vpop.f32.mrb[0].mxu0
  %v139 = vpop.f32.mrb[0].mxu0
  %v140 = vadd.f32 %v48, %v139
  %v141 = vpop.f32.mrb[0].mxu0
  %142 = vdwg.mxu0
  %v143 = vmax.f32 %v137, 0.0
  %v144 = vmax.f32 %v140, 0.0
  %v145 = vpack.c.bf16 %v144, %v143
  %v146 = vld [vmem:[%s3] sm:$0xf]
  %v147 = vld [vmem:[%s3 + $0x4] sm:$0xf]
  %v148 = vld [vmem:[%s3 + $0x8] sm:$0xf]
  %v149 = vld [vmem:[%s3 + $0xc] sm:$0xf]
  %v150 = vld [vmem:[%s3 + $0x10] sm:$0xf]
  %v151 = vld [vmem:[%s3 + $0x14] sm:$0xf]
  %v152 = vld [vmem:[%s3 + $0x18] sm:$0xf]
  %v153 = vld [vmem:[%s3 + $0x1c] sm:$0xf]
  %v154 = vld [vmem:[%s3 + $0x20] sm:$0xf]
  %v155 = vld [vmem:[%s3 + $0x24] sm:$0xf]
  %v156 = vld [vmem:[%s3 + $0x28] sm:$0xf]
  %v157 = vld [vmem:[%s3 + $0x2c] sm:$0xf]
  %v158 = vld [vmem:[%s3 + $0x30] sm:$0xf]
  %v159 = vld [vmem:[%s3 + $0x34] sm:$0xf]
  %v160 = vld [vmem:[%s3 + $0x38] sm:$0xf]
  %v161 = vld [vmem:[%s3 + $0x3c] sm:$0xf]
  %v162 = vld [vmem:[%s4] sm:$0x1]
  %v164 = vlaneseq
  %v165 = vshrl.u32 %v164, 7
  %v166 = vsub.s32 0, %v165
  %v167 = vrot.slane %v162, %v166
  %v185 = vunpack.c.l.b16 %v146
  %v186 = vunpack.c.l.b16 %v147
  %v187 = vunpack.c.l.b16 %v148
  %v188 = vunpack.c.l.b16 %v149
  %v189 = vunpack.c.l.b16 %v150
  %v190 = vunpack.c.l.b16 %v151
  %v191 = vunpack.c.l.b16 %v152
  %v192 = vunpack.c.l.b16 %v153
  %v193 = vunpack.c.l.b16 %v154
  %v194 = vunpack.c.l.b16 %v155
  %v195 = vunpack.c.l.b16 %v156
  %v196 = vunpack.c.l.b16 %v157
  %v197 = vunpack.c.l.b16 %v158
  %v198 = vunpack.c.l.b16 %v159
  %v199 = vunpack.c.l.b16 %v160
  %v200 = vunpack.c.l.b16 %v161
  %v201 = vpack.c.b16 %v186, %v185
  %v202 = vpack.c.b16 %v188, %v187
  %v203 = vpack.c.b16 %v190, %v189
  %v204 = vpack.c.b16 %v192, %v191
  %v205 = vpack.c.b16 %v194, %v193
  %v206 = vpack.c.b16 %v196, %v195
  %v207 = vpack.c.b16 %v198, %v197
  %v208 = vpack.c.b16 %v200, %v199
  %217 = vmatprep.subr.bf16.mxu0 0
  %218 = vmatpush1.bf16.msra.mxu0 %v201
  %219 = vmatprep.subr.bf16.mxu0 0
  %220 = vmatpush1.bf16.msra.mxu0 %v202
  %221 = vmatprep.subr.bf16.mxu0 0
  %222 = vmatpush1.bf16.msra.mxu0 %v203
  %223 = vmatprep.subr.bf16.mxu0 0
  %224 = vmatpush1.bf16.msra.mxu0 %v204
  %225 = vmatprep.subr.bf16.mxu0 0
  %226 = vmatpush1.bf16.msra.mxu0 %v205
  %227 = vmatprep.subr.bf16.mxu0 0
  %228 = vmatpush1.bf16.msra.mxu0 %v206
  %229 = vmatprep.subr.bf16.mxu0 0
  %230 = vmatpush1.bf16.msra.mxu0 %v207
  %231 = vmatprep.subr.bf16.mxu0 0
  %232 = vmatpush1.bf16.msra.mxu0 %v208
  %233 = vmatprep.subr.bf16.mxu0 0
  %234 = vmatpush1.bf16.msra.mxu0 0
  %235 = vmatprep.subr.bf16.mxu0 0
  %236 = vmatpush1.bf16.msra.mxu0 0
  %237 = vmatprep.subr.bf16.mxu0 0
  %238 = vmatpush1.bf16.msra.mxu0 0
  %239 = vmatprep.subr.bf16.mxu0 0
  %240 = vmatpush1.bf16.msra.mxu0 0
  %241 = vmatprep.subr.bf16.mxu0 0
  %242 = vmatpush1.bf16.msra.mxu0 0
  %243 = vmatprep.subr.bf16.mxu0 0
  %244 = vmatpush1.bf16.msra.mxu0 0
  %245 = vmatprep.subr.bf16.mxu0 0
  %246 = vmatpush1.bf16.msra.mxu0 0
  %247 = vmatprep.subr.bf16.mxu0 0
  %248 = vmatpush1.bf16.msra.mxu0 0
  %249 = vmatprep.mubr.bf16.mxu0 0
  %250 = vmatmul.mubr.bf16.gmra.mrb[0].mxu0 %v145
  %v251 = vpop.f32.mrb[0].mxu0
  %v252 = vadd.f32 %v167, %v251
  %v253 = vpop.f32.mrb[0].mxu0
  %v254 = vpop.f32.mrb[0].mxu0
  %v255 = vadd.f32 %v167, %v254
  %v256 = vpop.f32.mrb[0].mxu0
  %257 = vdwg.mxu0
  %v258 = vmax.f32 %v252, 0.0
  %v259 = vmax.f32 %v255, 0.0
  %v260 = vld [vmem:[%s5] sm:$0x1]
  %s261 = sld [smem:[#allocation2]]
  %v262 = vstv %s261
  %vm263 = vcmask 523264
  %v265 = vsel %vm263, %v260, 0
  %v268 = vsel %vm263, %v258, 0
  %v271 = vsel %vm263, %v259, 0
  %273 = vmatprep.subr.mxu0 0.0
  %274 = vmatpush1.xpose.msra.mxu0 %v268
  %275 = vmatprep.subr.mxu0 0.0
  %276 = vmatpush1.xpose.msra.mxu0 %v271
  %277 = vmatprep.subr.mxu0 0.0
  %278 = vmatpush1.xpose.msra.mxu0 0.0
  %279 = vmatprep.subr.mxu0 0.0
  %280 = vmatpush1.xpose.msra.mxu0 0.0
  %281 = vmatprep.subr.mxu0 0.0
  %282 = vmatpush1.xpose.msra.mxu0 0.0
  %283 = vmatprep.subr.mxu0 0.0
  %284 = vmatpush1.xpose.msra.mxu0 0.0
  %285 = vmatprep.subr.mxu0 0.0
  %286 = vmatpush1.xpose.msra.mxu0 0.0
  %287 = vmatprep.subr.mxu0 0.0
  %288 = vmatpush1.xpose.msra.mxu0 0.0
  %289 = vmatprep.subr.mxu0 0.0
  %290 = vmatpush1.xpose.msra.mxu0 0.0
  %291 = vmatprep.subr.mxu0 0.0
  %292 = vmatpush1.xpose.msra.mxu0 0.0
  %293 = vmatprep.subr.mxu0 0.0
  %294 = vmatpush1.xpose.msra.mxu0 0.0
  %295 = vmatprep.subr.mxu0 0.0
  %296 = vmatpush1.xpose.msra.mxu0 0.0
  %297 = vmatprep.subr.mxu0 0.0
  %298 = vmatpush1.xpose.msra.mxu0 0.0
  %299 = vmatprep.subr.mxu0 0.0
  %300 = vmatpush1.xpose.msra.mxu0 0.0
  %301 = vmatprep.subr.mxu0 0.0
  %302 = vmatpush1.xpose.msra.mxu0 0.0
  %303 = vmatprep.subr.mxu0 0.0
  %304 = vmatpush1.xpose.msra.mxu0 0.0
  %305 = vmatprep.subr.mxu0 0.0
  %306 = vmatpush1.xpose.msra.mxu0 0.0
  %307 = vmatprep.subr.mxu0 0.0
  %308 = vmatpush1.xpose.msra.mxu0 0.0
  %309 = vmatprep.subr.mxu0 0.0
  %310 = vmatpush1.xpose.msra.mxu0 0.0
  %311 = vmatprep.subr.mxu0 0.0
  %312 = vmatpush1.xpose.msra.mxu0 0.0
  %313 = vmatprep.subr.mxu0 0.0
  %314 = vmatpush1.xpose.msra.mxu0 0.0
  %315 = vmatprep.subr.mxu0 0.0
  %316 = vmatpush1.xpose.msra.mxu0 0.0
  %317 = vmatprep.subr.mxu0 0.0
  %318 = vmatpush1.xpose.msra.mxu0 0.0
  %319 = vmatprep.subr.mxu0 0.0
  %320 = vmatpush1.xpose.msra.mxu0 0.0
  %321 = vmatprep.subr.mxu0 0.0
  %322 = vmatpush1.xpose.msra.mxu0 0.0
  %323 = vmatprep.subr.mxu0 0.0
  %324 = vmatpush1.xpose.msra.mxu0 0.0
  %325 = vmatprep.subr.mxu0 0.0
  %326 = vmatpush1.xpose.msra.mxu0 0.0
  %327 = vmatprep.subr.mxu0 0.0
  %328 = vmatpush1.xpose.msra.mxu0 0.0
  %329 = vmatprep.subr.mxu0 0.0
  %330 = vmatpush1.xpose.msra.mxu0 0.0
  %331 = vmatprep.subr.mxu0 0.0
  %332 = vmatpush1.xpose.msra.mxu0 0.0
  %333 = vmatprep.subr.mxu0 0.0
  %334 = vmatpush1.xpose.msra.mxu0 0.0
  %335 = vmatprep.subr.mxu0 0.0
  %336 = vmatpush1.xpose.msra.mxu0 0.0
  %337 = vmatprep.mubr.f32.mxu0 0.0
  %338 = vmatmul.mubr.f32.gmra.mrb[0].mxu0 %v265
  %v339 = vpop.f32.mrb[0].mxu0
  %v340 = vadd.f32 %v262, %v339
  %v341 = vpop.f32.mrb[0].mxu0
  %342 = vdwg.mxu0
  %vm343 = vcmask 122880
  %344 = vst.msk [vmem:[%s7] sm:$0x1] %vm343, %v340
  // Predicated region
  $region30: #{recommendation_forward.1} parent=0 // pred_check
    _
  $region31: #{recommendation_forward.1} parent=0 // pred_check_branch
    %346 = sbr.rel (0) target = $region33
  $region32: #{recommendation_forward.1} parent=0 // pred_region
    _
  $region33: #{recommendation_forward.1} parent=0 // pred_fallthru
    _
  // Predicated region
  $region34: #{recommendation_forward.1} parent=0 // pred_check
    _
  $region35: #{recommendation_forward.1} parent=0 // pred_check_branch
    %348 = sbr.rel (0) target = $region37
  $region36: #{recommendation_forward.1} parent=0 // pred_region
    _
  $region37: #{recommendation_forward.1} parent=0 // pred_fallthru
    _

</llo_original>
